<compile_context>
chip_gen: v5e
topology: v5e:2x2
jax: 0.10.0
libtpu: 0.0.40
codegen_flags: <defaults>
</compile_context>

<pallas_src>
import jax
import jax.numpy as jnp
from jax.experimental import pallas as pl
from jax.experimental.pallas import tpu as pltpu

_LANE = 128
_SUBLANE = 8
_SMALL_BYTES = 1 << 20  # below this, a single un-gridded block is fastest


def _copy_kernel(x_ref, o_ref):
    # Pure tile copy: one vld -> one vst per vreg, no relayout.
    o_ref[...] = x_ref[...]


def const_layer_forward_nokernel(const: jax.Array) -> jax.Array:
    """Recommended production path: zero-copy unsqueeze (no Pallas kernel)."""
    return const[None, ...]


def _cdiv(a: int, b: int) -> int:
    return -(-a // b)


def _round_up(x: int, m: int) -> int:
    return _cdiv(x, m) * m


def _row_align(dtype) -> int:
    """Dtype-aware sublane alignment: 8 rows f32, 16 bf16, 32 int8/fp8."""
    itemsize = jnp.dtype(dtype).itemsize
    packing = max(1, 4 // itemsize)
    return _SUBLANE * packing


def _target_block_bytes() -> int:
    """Per-generation copy block size.

    v7x (≈3.2 TB/s HBM): 4 MiB blocks amortize the ~0.35 µs per-grid-step
    overhead; with in+out double buffering that is 16 MiB, well under the
    32 MiB scoped-VMEM default. v5e/v6e: 2 MiB blocks (8 MiB buffered) fit
    v5e's 16 MiB scoped default and already hit ~85% of the v6e copy roofline.
    """
    try:
        kind = jax.devices()[0].device_kind.lower()
    except Exception:  # pragma: no cover - defensive default
        return 2 << 20
    if "v5" in kind or "v6" in kind:
        return 2 << 20
    if "7" in kind:
        return 4 << 20
    return 2 << 20


def _single_block_copy(x2d: jax.Array, cost: pl.CostEstimate) -> jax.Array:
    """One full-array block — for KB-sized constants (launch-dominated)."""
    r, c = x2d.shape
    return pl.pallas_call(
        _copy_kernel,
        out_shape=jax.ShapeDtypeStruct((r, c), x2d.dtype),
        grid=(1,),
        # block shape == full array shape, so the (8,128) rule is waived.
        in_specs=[pl.BlockSpec((r, c), lambda i: (0, 0))],
        out_specs=pl.BlockSpec((r, c), lambda i: (0, 0)),
        cost_estimate=cost,
    )(x2d)


def _tiled_copy(x2d: jax.Array, tile_rows: int, cost: pl.CostEstimate) -> jax.Array:
    """Lane-dense (rows, 128) copy, tiled over rows, row axis parallel."""
    rows, _ = x2d.shape
    grid = (_cdiv(rows, tile_rows),)
    return pl.pallas_call(
        _copy_kernel,
        out_shape=jax.ShapeDtypeStruct(x2d.shape, x2d.dtype),
        grid=grid,
        in_specs=[pl.BlockSpec((tile_rows, _LANE), lambda i: (i, 0))],
        out_specs=pl.BlockSpec((tile_rows, _LANE), lambda i: (i, 0)),
        compiler_params=pltpu.CompilerParams(
            dimension_semantics=("parallel",)),
        cost_estimate=cost,
    )(x2d)


def _choose_tile_rows(rows: int, row_align: int, block_rows: int) -> int:
    """Pick a tile height that (a) respects dtype sublane alignment,
    (b) yields >=2 (preferably an even number of) near-equal blocks so v7x's
    two TensorCores split the copy, and (c) avoids a tiny ragged tail block."""
    nblocks = _cdiv(rows, block_rows)
    if nblocks < 2:
        nblocks = 2
    elif nblocks % 2:
        nblocks += 1
    tile_rows = _round_up(_cdiv(rows, nblocks), row_align)
    return max(row_align, min(tile_rows, rows))


def const_layer_forward(const: jax.Array, *, block_rows: int | None = None) -> jax.Array:
    """Pallas implementation of ConstLayer.forward().

    Args:
      const: parameter of shape (out_channels, *const_size) — any rank >= 1.
      block_rows: optional override of the copy tile height (rows of 128 lanes).
    Returns:
      Array of shape (1, out_channels, *const_size), same dtype as `const`.
    """
    out_shape = (1, *const.shape)
    dtype = const.dtype
    itemsize = jnp.dtype(dtype).itemsize
    n = int(const.size)
    nbytes = n * itemsize
    cost = pl.CostEstimate(flops=0, transcendentals=0, bytes_accessed=2 * nbytes)

    row_align = _row_align(dtype)
    chunk = row_align * _LANE  # minimum lane-dense unit (elements)

    # --- Small constants (the module's actual case): single un-gridded block.
    if nbytes <= _SMALL_BYTES:
        if n % _LANE == 0:
            x2d = const.reshape(n // _LANE, _LANE)   # lane-dense single block
        else:
            last = const.shape[-1] if const.ndim >= 2 else n
            x2d = const.reshape(-1, last)            # full-array block
        return _single_block_copy(x2d, cost).reshape(out_shape)

    # --- Large constants: lane-dense tiled copy.
    if block_rows is None:
        block_rows = max(row_align, _target_block_bytes() // (_LANE * itemsize))
    block_rows = _round_up(block_rows, row_align)

    if n % chunk == 0:
        rows = n // _LANE
        tile_rows = _choose_tile_rows(rows, row_align, block_rows)
        out2d = _tiled_copy(const.reshape(rows, _LANE), tile_rows, cost)
        return out2d.reshape(out_shape)

    # Non lane-dense-aligned element count: pad the flat view up to an aligned
    # multiple in the wrapper, reuse the tiled path, slice back afterwards.
    # (Never a single full-array VMEM block -> no scoped-VMEM OOM, no masked
    # narrow-lane stores inside the kernel.)
    pad = (-n) % chunk
    flat = jnp.pad(const.reshape(-1), (0, pad))
    rows = flat.size // _LANE
    tile_rows = _choose_tile_rows(rows, row_align, block_rows)
    out_flat = _tiled_copy(flat.reshape(rows, _LANE), tile_rows, cost)
    return out_flat.reshape(-1)[:n].reshape(out_shape)


if __name__ == "__main__":
    key = jax.random.PRNGKey(0)

    # 1) Module-consistent small shape: out_channels=4, const_size=(16, 16).
    out_channels = 4
    const_size = (16, 16)
    const_param = jax.random.normal(
        key, (out_channels, *const_size), dtype=jnp.float32
    )
    out = jax.block_until_ready(const_layer_forward(const_param))
    ref = const_param[None, ...]
    assert out.shape == (1, out_channels, *const_size), out.shape
    assert out.dtype == const_param.dtype
    assert bool(jnp.all(out == ref))

    # 2) Small, non-divisible shape -> single full-array block fallback.
    k1, k2, k3 = jax.random.split(key, 3)
    odd = jax.random.normal(k1, (3, 5, 7), dtype=jnp.float32)
    out_odd = jax.block_until_ready(const_layer_forward(odd))
    assert out_odd.shape == (1, 3, 5, 7)
    assert bool(jnp.all(out_odd == odd[None, ...]))

    # 3) Just over 1 MiB, lane-dense -> tiled multi-block parallel path.
    big = jax.random.normal(k2, (4, 576, 128), dtype=jnp.float32)   # 1.125 MiB
    out_big = jax.block_until_ready(const_layer_forward(big))
    assert out_big.shape == (1, 4, 576, 128)
    assert bool(jnp.all(out_big == big[None, ...]))

    # 4) Just over 1 MiB, NOT lane-dense -> pad + tiled path + slice.
    ragged = jax.random.normal(k3, (3, 1000, 101), dtype=jnp.float32)  # ~1.16 MiB
    out_rag = jax.block_until_ready(const_layer_forward(ragged))
    assert out_rag.shape == (1, 3, 1000, 101)
    assert bool(jnp.all(out_rag == ragged[None, ...]))

    print("KERNEL_OK")
</pallas_src>

<mosaic_0001>
module attributes {stable_mosaic.version = 11 : i64} {
  func.func @_copy_kernel(%arg0: i32, %arg1: memref<8x128xf32, #tpu.memory_space<vmem>>, %arg2: memref<8x128xf32, #tpu.memory_space<vmem>>) attributes {dimension_semantics = [#tpu.dimension_semantics<arbitrary>], iteration_bounds = array<i64: 1>, scalar_prefetch = 0 : i64, scratch_operands = 0 : i64, tpu.core_type = #tpu.core_type<tc>, window_params = [{pipeline_mode = #tpu.pipeline_mode<synchronous>, transform_indices = @transform_0, window_bounds = array<i64: 8, 128>}, {pipeline_mode = #tpu.pipeline_mode<synchronous>, transform_indices = @transform_1, window_bounds = array<i64: 8, 128>}]} {
    %c0 = arith.constant 0 : index
    %c0_0 = arith.constant 0 : index
    %0 = vector.load %arg1[%c0, %c0_0] : memref<8x128xf32, #tpu.memory_space<vmem>>, vector<8x128xf32>
    %c0_1 = arith.constant 0 : index
    %c0_2 = arith.constant 0 : index
    %1 = vector.load %arg2[%c0_1, %c0_2] : memref<8x128xf32, #tpu.memory_space<vmem>>, vector<8x128xf32>
    tpu.vector_store %arg2[%c0_1, %c0_2], %0 {strides = array<i32>} : memref<8x128xf32, #tpu.memory_space<vmem>>, vector<8x128xf32>,
    return
  }
  func.func @transform_0(%arg0: i32) -> (i32, i32) {
    %c0_i32 = arith.constant 0 : i32
    %c0_i32_0 = arith.constant 0 : i32
    %c0_i32_1 = arith.constant 0 : i32
    return %c0_i32, %c0_i32_0 : i32, i32
  }
  func.func @transform_1(%arg0: i32) -> (i32, i32) {
    %c0_i32 = arith.constant 0 : i32
    %c0_i32_0 = arith.constant 0 : i32
    %c0_i32_1 = arith.constant 0 : i32
    return %c0_i32, %c0_i32_0 : i32, i32
  }
}

</mosaic_0001>

<llo_original>
// kernel: tpu_custom_call.1
$region0: #{tpu_custom_call.1}
  #allocation0 [shape = 'u32[]', space=smem, size = 0x4, offset = 0x4, fixed_abs, tag = 'smem constant byte address 0x4 - core index']
  #allocation1 [shape = 'u32[72,128]{1,0:T(1,128)}', space=vmem, size = 0x9000, scoped, tag = 'internal scratch']
  %s0 = inlined_call_operand.hbm [shape: f32[8,128], index: 0, kind: input, shape index: {}]
  %s1 = inlined_call_operand.hbm [shape: f32[8,128], index: 1, kind: output, shape index: {}]
  %s2 = sld [smem:[#allocation0]]
  $region18: #{tpu_custom_call.1} parent=0
    _
  %s4 = ssub.s32 1, %s2
  %s5 = scalar_select 0, %s4, %s2
  $region1: #{tpu_custom_call.1} parent=0
    #allocation2 [shape = 'u8[4096]{0}', space=vmem, size = 0x1000, scoped, tag = 'input window, operand 0, single buffered']
    #allocation3 [shape = 's32[1]{0}', space=sflag, size = 0x4, scoped, tag = 'scoped memory for tpu_custom_call.1']
    #allocation4 [shape = 's32[1]{0}', space=sflag, size = 0x4, scoped, tag = 'scoped memory for tpu_custom_call.1']
    #allocation5 [shape = 'u8[4096]{0}', space=vmem, size = 0x1000, scoped, tag = 'output window, operand 0, single buffered']
    %6 = vsyncpa [#allocation3], 0
    %7 = vsyncpa [#allocation4], 0
    // Predicated region
    $region2: #{tpu_custom_call.1} parent=1 // pred_check
      _
    $region3: #{tpu_custom_call.1} parent=1 // pred_check_branch
      %9 = sbr.rel (0) target = $region5
    $region4: #{tpu_custom_call.1} parent=1 // pred_region
      %11 = vsyncadd [#allocation3], 0
      %s13 = sshll.u32 %s0, 4
      %s14 = int_to_ptr.hbm [resolvable:$true] %s13
      %s15 = sshll.u32 [#allocation2], 4
      %s16 = int_to_ptr.vmem [resolvable:$true] %s15
      %18 = dma.hbm_to_vmem [thread:$0]  %s14, 128, %s16, [#allocation3]
    $region5: #{tpu_custom_call.1} parent=1 // pred_fallthru
      _
    // Predicated region
    $region6: #{tpu_custom_call.1} parent=1 // pred_check
      _
    $region7: #{tpu_custom_call.1} parent=1 // pred_check_branch
      %20 = sbr.rel (0) target = $region9
    $region8: #{tpu_custom_call.1} parent=1 // pred_region
      %22 = dma.done [#allocation3], 128
    $region9: #{tpu_custom_call.1} parent=1 // pred_fallthru
      _
    %v23 = vld [vmem:[#allocation2] sm:$0xff]
    %24 = vst [vmem:[#allocation5] sm:$0xff] %v23
    // Predicated region
    $region10: #{tpu_custom_call.1} parent=1 // pred_check
      _
    $region11: #{tpu_custom_call.1} parent=1 // pred_check_branch
      %26 = sbr.rel (0) target = $region13
    $region12: #{tpu_custom_call.1} parent=1 // pred_region
      %28 = vsyncadd [#allocation4], 0
      %s30 = sshll.u32 [#allocation5], 4
      %s31 = int_to_ptr.vmem [resolvable:$true] %s30
      %s32 = sshll.u32 %s1, 4
      %s33 = int_to_ptr.hbm [resolvable:$true] %s32
      %35 = dma.vmem_to_hbm [thread:$0]  %s31, 128, %s33, [#allocation4]
    $region13: #{tpu_custom_call.1} parent=1 // pred_fallthru
      _
    // Predicated region
    $region14: #{tpu_custom_call.1} parent=1 // pred_check
      _
    $region15: #{tpu_custom_call.1} parent=1 // pred_check_branch
      %37 = sbr.rel (0) target = $region17
    $region16: #{tpu_custom_call.1} parent=1 // pred_region
      %39 = dma.done [#allocation4], 128
    $region17: #{tpu_custom_call.1} parent=1 // pred_fallthru
      _
    %40 = vsyncpa [#allocation3], 1
    %41 = vsyncpa [#allocation4], 1

</llo_original>
